<compile_context>
chip_gen: v5e
topology: v5e:2x2
jax: 0.10.0
libtpu: 0.0.40
codegen_flags: <defaults>
</compile_context>

<pallas_src>
import functools

import jax
import jax.numpy as jnp
from jax.experimental import pallas as pl
from jax.experimental.pallas import tpu as pltpu

NEG_SLOPE = 0.01   # torch.nn.LeakyReLU default negative slope
LANE = 128         # vreg lane width
SUBLANE = 8        # vreg sublane height
MAX_TB = 1024      # max batch tile (plenty of VMEM headroom on v5e/v6e/v7x)


def _round_up(n, m):
    return ((n + m - 1) // m) * m


def _fused_ae_kernel(x_ref, *refs, acts, use_bf16):
    """Entire autoencoder forward for one batch tile.

    refs = (w0, b0, w1, b1, ..., wL-1, bL-1, out_ref); weight output dims are
    padded to a multiple of 128; weights are stored (in, out) so y = x @ W + b.
    """
    o_ref = refs[-1]
    wb = refs[:-1]
    h = x_ref[...].astype(jnp.float32)
    for idx, apply_act in enumerate(acts):
        w = wb[2 * idx][...]                          # pre-cast (bf16 or f32)
        b = wb[2 * idx + 1][...].astype(jnp.float32)  # bias add in f32
        lhs = h.astype(jnp.bfloat16) if use_bf16 else h
        y = jnp.dot(lhs, w, preferred_element_type=jnp.float32)
        y = y + b
        if apply_act:
            y = jnp.maximum(y, NEG_SLOPE * y)          # LeakyReLU, 2 VALU ops
        h = y
    o_ref[...] = h.astype(o_ref.dtype)


def autoencoder_forward(x, enc_params, dec_params, *, use_bf16_matmul=True):
    """Fused Pallas forward: reconstruction = decode(encode(x))."""
    params = list(enc_params) + list(dec_params)
    n_enc, n_dec = len(enc_params), len(dec_params)
    # LeakyReLU after every layer except the last of each block (output_fn=None).
    acts = tuple([i != n_enc - 1 for i in range(n_enc)] +
                 [i != n_dec - 1 for i in range(n_dec)])

    B, Din = x.shape
    dtype = x.dtype
    assert params[0][0].shape[0] == Din

    # True output dims per layer and lane-padded versions (outputs only; the
    # raw input feature dim is left unpadded).
    true_dims = [Din] + [w.shape[1] for (w, _) in params]
    pdims = [Din] + [_round_up(d, LANE) for d in true_dims[1:]]

    # Batch tiling: big sublane-aligned tile; guarantee >= 2 grid steps when the
    # batch allows it so v7x can shard the "parallel" axis over both TCs.
    TB = min(MAX_TB, _round_up(B, SUBLANE))
    if B > SUBLANE and _round_up(B, TB) // TB < 2:
        TB = max(SUBLANE, _round_up(pl.cdiv(B, 2), SUBLANE))
    B_pad = _round_up(B, TB)
    grid = (B_pad // TB,)

    # Pad batch rows only if needed; never pad the input feature dim.
    x_in = x if B_pad == B else jnp.zeros((B_pad, Din), dtype).at[:B].set(x)

    w_dtype = jnp.bfloat16 if use_bf16_matmul else dtype
    padded_params = []
    in_specs = [pl.BlockSpec((TB, Din), lambda i: (i, 0))]
    for li, (w, b) in enumerate(params):
        pin, pout = pdims[li], pdims[li + 1]
        w_p = (jnp.zeros((pin, pout), dtype)
               .at[:w.shape[0], :w.shape[1]].set(w)
               .astype(w_dtype))                       # pre-cast outside kernel
        b_p = jnp.zeros((1, pout), dtype).at[0, :b.shape[0]].set(b)
        padded_params += [w_p, b_p]
        # Weights/biases: constant block index -> VMEM-resident across batch tiles.
        in_specs += [
            pl.BlockSpec((pin, pout), lambda i: (0, 0)),
            pl.BlockSpec((1, pout), lambda i: (0, 0)),
        ]

    Dout = true_dims[-1]
    pout_last = pdims[-1]

    # CostEstimate from TRUE layer dims (advisory for XLA scheduling).
    flops = sum(2 * B * true_dims[i] * true_dims[i + 1] for i in range(len(params)))
    itemsize = jnp.dtype(dtype).itemsize
    w_itemsize = jnp.dtype(w_dtype).itemsize
    bytes_accessed = (B * Din * itemsize + B * Dout * itemsize +
                      sum(w.size * w_itemsize + b.size * itemsize
                          for (w, b) in params))

    kernel = functools.partial(_fused_ae_kernel, acts=acts,
                               use_bf16=use_bf16_matmul)
    out_p = pl.pallas_call(
        kernel,
        out_shape=jax.ShapeDtypeStruct((B_pad, pout_last), dtype),
        grid=grid,
        in_specs=in_specs,
        out_specs=pl.BlockSpec((TB, pout_last), lambda i: (i, 0)),
        compiler_params=pltpu.CompilerParams(
            dimension_semantics=("parallel",),
        ),
        cost_estimate=pl.CostEstimate(
            flops=flops, transcendentals=0, bytes_accessed=bytes_accessed),
    )(x_in, *padded_params)

    return out_p[:B, :Dout]


def init_linear_params(key, fan_in, fan_out, dtype=jnp.float32):
    """Mirror torch.nn.Linear default init (uniform ±1/sqrt(fan_in))."""
    kw, kb = jax.random.split(key)
    bound = 1.0 / jnp.sqrt(jnp.asarray(fan_in, dtype))
    w = jax.random.uniform(kw, (fan_in, fan_out), dtype, minval=-bound, maxval=bound)
    b = jax.random.uniform(kb, (fan_out,), dtype, minval=-bound, maxval=bound)
    return w, b


def init_autoencoder_params(key, layers):
    """Encoder (layers) and decoder (layers reversed) Linear parameters."""
    enc_sizes = list(zip(layers[:-1], layers[1:]))
    dec_layers = layers[::-1]
    dec_sizes = list(zip(dec_layers[:-1], dec_layers[1:]))
    keys = jax.random.split(key, len(enc_sizes) + len(dec_sizes))
    enc_params = [init_linear_params(k, i, o)
                  for k, (i, o) in zip(keys[:len(enc_sizes)], enc_sizes)]
    dec_params = [init_linear_params(k, i, o)
                  for k, (i, o) in zip(keys[len(enc_sizes):], dec_sizes)]
    return enc_params, dec_params


def reference_forward(x, enc_params, dec_params):
    """Pure-JAX reference for correctness checking."""
    def block(h, params):
        n = len(params)
        for idx, (w, b) in enumerate(params):
            y = h @ w + b
            if idx != n - 1:
                y = jnp.where(y >= 0, y, NEG_SLOPE * y)
            h = y
        return h
    return block(block(x, enc_params), dec_params)


if __name__ == "__main__":
    # Small, module-consistent shapes: layers from input dim -> embedding dim.
    layers = [64, 32, 16, 8]
    batch = 8

    root = jax.random.PRNGKey(0)
    k_data, k_params = jax.random.split(root)

    x = jax.random.normal(k_data, (batch, layers[0]), dtype=jnp.float32)
    enc_params, dec_params = init_autoencoder_params(k_params, layers)

    ref = reference_forward(x, enc_params, dec_params)

    # Default (perf) path: bf16 MXU with f32 accumulation -> relaxed tolerance.
    out_bf16 = jax.block_until_ready(
        autoencoder_forward(x, enc_params, dec_params))
    # Strict-semantics f32 path for the tight correctness check.
    out_f32 = jax.block_until_ready(
        autoencoder_forward(x, enc_params, dec_params, use_bf16_matmul=False))

    assert out_bf16.shape == (batch, layers[0])
    assert out_f32.shape == (batch, layers[0])
    assert jnp.allclose(out_f32, ref, atol=1e-5, rtol=1e-5), \
        "f32 path mismatch vs pure-JAX reference"
    assert jnp.allclose(out_bf16, ref, atol=5e-2, rtol=5e-2), \
        "bf16 path mismatch vs pure-JAX reference"

    print("KERNEL_OK")
</pallas_src>

<mosaic_0001>
module attributes {stable_mosaic.version = 11 : i64} {
  func.func @_fused_ae_kernel(%arg0: i32, %arg1: memref<8x64xf32, #tpu.memory_space<vmem>>, %arg2: memref<64x128xbf16, #tpu.memory_space<vmem>>, %arg3: memref<1x128xf32, #tpu.memory_space<vmem>>, %arg4: memref<128x128xbf16, #tpu.memory_space<vmem>>, %arg5: memref<1x128xf32, #tpu.memory_space<vmem>>, %arg6: memref<128x128xbf16, #tpu.memory_space<vmem>>, %arg7: memref<1x128xf32, #tpu.memory_space<vmem>>, %arg8: memref<128x128xbf16, #tpu.memory_space<vmem>>, %arg9: memref<1x128xf32, #tpu.memory_space<vmem>>, %arg10: memref<128x128xbf16, #tpu.memory_space<vmem>>, %arg11: memref<1x128xf32, #tpu.memory_space<vmem>>, %arg12: memref<128x128xbf16, #tpu.memory_space<vmem>>, %arg13: memref<1x128xf32, #tpu.memory_space<vmem>>, %arg14: memref<8x128xf32, #tpu.memory_space<vmem>>) attributes {dimension_semantics = [#tpu.dimension_semantics<parallel>], iteration_bounds = array<i64: 1>, scalar_prefetch = 0 : i64, scratch_operands = 0 : i64, tpu.core_type = #tpu.core_type<tc>, window_params = [{transform_indices = @transform_0, window_bounds = array<i64: 8, 64>}, {pipeline_mode = #tpu.pipeline_mode<synchronous>, transform_indices = @transform_1, window_bounds = array<i64: 64, 128>}, {pipeline_mode = #tpu.pipeline_mode<synchronous>, transform_indices = @transform_2, window_bounds = array<i64: 1, 128>}, {pipeline_mode = #tpu.pipeline_mode<synchronous>, transform_indices = @transform_3, window_bounds = array<i64: 128, 128>}, {pipeline_mode = #tpu.pipeline_mode<synchronous>, transform_indices = @transform_4, window_bounds = array<i64: 1, 128>}, {pipeline_mode = #tpu.pipeline_mode<synchronous>, transform_indices = @transform_5, window_bounds = array<i64: 128, 128>}, {pipeline_mode = #tpu.pipeline_mode<synchronous>, transform_indices = @transform_6, window_bounds = array<i64: 1, 128>}, {pipeline_mode = #tpu.pipeline_mode<synchronous>, transform_indices = @transform_7, window_bounds = array<i64: 128, 128>}, {pipeline_mode = #tpu.pipeline_mode<synchronous>, transform_indices = @transform_8, window_bounds = array<i64: 1, 128>}, {pipeline_mode = #tpu.pipeline_mode<synchronous>, transform_indices = @transform_9, window_bounds = array<i64: 128, 128>}, {pipeline_mode = #tpu.pipeline_mode<synchronous>, transform_indices = @transform_10, window_bounds = array<i64: 1, 128>}, {pipeline_mode = #tpu.pipeline_mode<synchronous>, transform_indices = @transform_11, window_bounds = array<i64: 128, 128>}, {pipeline_mode = #tpu.pipeline_mode<synchronous>, transform_indices = @transform_12, window_bounds = array<i64: 1, 128>}, {transform_indices = @transform_13, window_bounds = array<i64: 8, 128>}]} {
    %c0 = arith.constant 0 : index
    %c0_0 = arith.constant 0 : index
    %0 = vector.load %arg1[%c0, %c0_0] : memref<8x64xf32, #tpu.memory_space<vmem>>, vector<8x64xf32>
    %c0_1 = arith.constant 0 : index
    %c0_2 = arith.constant 0 : index
    %1 = vector.load %arg2[%c0_1, %c0_2] : memref<64x128xbf16, #tpu.memory_space<vmem>>, vector<64x128xbf16>
    %c0_3 = arith.constant 0 : index
    %c0_4 = arith.constant 0 : index
    %2 = vector.load %arg3[%c0_3, %c0_4] : memref<1x128xf32, #tpu.memory_space<vmem>>, vector<1x128xf32>
    %3 = arith.truncf %0 : vector<8x64xf32> to vector<8x64xbf16>
    %cst = arith.constant dense<0.000000e+00> : vector<8x128xf32>
    %4 = tpu.matmul %3, %1, %cst {dimension_numbers = #tpu.dot_dimension_numbers<[1], [0], [0], [1], [0, 0, 1, 1], [], []>} : vector<8x64xbf16>, vector<64x128xbf16>, vector<8x128xf32> -> vector<8x128xf32>
    %5 = vector.broadcast %2 : vector<1x128xf32> to vector<8x128xf32>
    %6 = arith.addf %4, %5 : vector<8x128xf32>
    %cst_5 = arith.constant 0.00999999977 : f32
    %7 = vector.broadcast %cst_5 : f32 to vector<8x128xf32>
    %8 = arith.mulf %7, %6 : vector<8x128xf32>
    %9 = arith.maximumf %6, %8 : vector<8x128xf32>
    %c0_6 = arith.constant 0 : index
    %c0_7 = arith.constant 0 : index
    %10 = vector.load %arg4[%c0_6, %c0_7] : memref<128x128xbf16, #tpu.memory_space<vmem>>, vector<128x128xbf16>
    %c0_8 = arith.constant 0 : index
    %c0_9 = arith.constant 0 : index
    %11 = vector.load %arg5[%c0_8, %c0_9] : memref<1x128xf32, #tpu.memory_space<vmem>>, vector<1x128xf32>
    %12 = arith.truncf %9 : vector<8x128xf32> to vector<8x128xbf16>
    %cst_10 = arith.constant dense<0.000000e+00> : vector<8x128xf32>
    %13 = tpu.matmul %12, %10, %cst_10 {dimension_numbers = #tpu.dot_dimension_numbers<[1], [0], [0], [1], [0, 0, 1, 1], [], []>} : vector<8x128xbf16>, vector<128x128xbf16>, vector<8x128xf32> -> vector<8x128xf32>
    %14 = vector.broadcast %11 : vector<1x128xf32> to vector<8x128xf32>
    %15 = arith.addf %13, %14 : vector<8x128xf32>
    %cst_11 = arith.constant 0.00999999977 : f32
    %16 = vector.broadcast %cst_11 : f32 to vector<8x128xf32>
    %17 = arith.mulf %16, %15 : vector<8x128xf32>
    %18 = arith.maximumf %15, %17 : vector<8x128xf32>
    %c0_12 = arith.constant 0 : index
    %c0_13 = arith.constant 0 : index
    %19 = vector.load %arg6[%c0_12, %c0_13] : memref<128x128xbf16, #tpu.memory_space<vmem>>, vector<128x128xbf16>
    %c0_14 = arith.constant 0 : index
    %c0_15 = arith.constant 0 : index
    %20 = vector.load %arg7[%c0_14, %c0_15] : memref<1x128xf32, #tpu.memory_space<vmem>>, vector<1x128xf32>
    %21 = arith.truncf %18 : vector<8x128xf32> to vector<8x128xbf16>
    %cst_16 = arith.constant dense<0.000000e+00> : vector<8x128xf32>
    %22 = tpu.matmul %21, %19, %cst_16 {dimension_numbers = #tpu.dot_dimension_numbers<[1], [0], [0], [1], [0, 0, 1, 1], [], []>} : vector<8x128xbf16>, vector<128x128xbf16>, vector<8x128xf32> -> vector<8x128xf32>
    %23 = vector.broadcast %20 : vector<1x128xf32> to vector<8x128xf32>
    %24 = arith.addf %22, %23 : vector<8x128xf32>
    %c0_17 = arith.constant 0 : index
    %c0_18 = arith.constant 0 : index
    %25 = vector.load %arg8[%c0_17, %c0_18] : memref<128x128xbf16, #tpu.memory_space<vmem>>, vector<128x128xbf16>
    %c0_19 = arith.constant 0 : index
    %c0_20 = arith.constant 0 : index
    %26 = vector.load %arg9[%c0_19, %c0_20] : memref<1x128xf32, #tpu.memory_space<vmem>>, vector<1x128xf32>
    %27 = arith.truncf %24 : vector<8x128xf32> to vector<8x128xbf16>
    %cst_21 = arith.constant dense<0.000000e+00> : vector<8x128xf32>
    %28 = tpu.matmul %27, %25, %cst_21 {dimension_numbers = #tpu.dot_dimension_numbers<[1], [0], [0], [1], [0, 0, 1, 1], [], []>} : vector<8x128xbf16>, vector<128x128xbf16>, vector<8x128xf32> -> vector<8x128xf32>
    %29 = vector.broadcast %26 : vector<1x128xf32> to vector<8x128xf32>
    %30 = arith.addf %28, %29 : vector<8x128xf32>
    %cst_22 = arith.constant 0.00999999977 : f32
    %31 = vector.broadcast %cst_22 : f32 to vector<8x128xf32>
    %32 = arith.mulf %31, %30 : vector<8x128xf32>
    %33 = arith.maximumf %30, %32 : vector<8x128xf32>
    %c0_23 = arith.constant 0 : index
    %c0_24 = arith.constant 0 : index
    %34 = vector.load %arg10[%c0_23, %c0_24] : memref<128x128xbf16, #tpu.memory_space<vmem>>, vector<128x128xbf16>
    %c0_25 = arith.constant 0 : index
    %c0_26 = arith.constant 0 : index
    %35 = vector.load %arg11[%c0_25, %c0_26] : memref<1x128xf32, #tpu.memory_space<vmem>>, vector<1x128xf32>
    %36 = arith.truncf %33 : vector<8x128xf32> to vector<8x128xbf16>
    %cst_27 = arith.constant dense<0.000000e+00> : vector<8x128xf32>
    %37 = tpu.matmul %36, %34, %cst_27 {dimension_numbers = #tpu.dot_dimension_numbers<[1], [0], [0], [1], [0, 0, 1, 1], [], []>} : vector<8x128xbf16>, vector<128x128xbf16>, vector<8x128xf32> -> vector<8x128xf32>
    %38 = vector.broadcast %35 : vector<1x128xf32> to vector<8x128xf32>
    %39 = arith.addf %37, %38 : vector<8x128xf32>
    %cst_28 = arith.constant 0.00999999977 : f32
    %40 = vector.broadcast %cst_28 : f32 to vector<8x128xf32>
    %41 = arith.mulf %40, %39 : vector<8x128xf32>
    %42 = arith.maximumf %39, %41 : vector<8x128xf32>
    %c0_29 = arith.constant 0 : index
    %c0_30 = arith.constant 0 : index
    %43 = vector.load %arg12[%c0_29, %c0_30] : memref<128x128xbf16, #tpu.memory_space<vmem>>, vector<128x128xbf16>
    %c0_31 = arith.constant 0 : index
    %c0_32 = arith.constant 0 : index
    %44 = vector.load %arg13[%c0_31, %c0_32] : memref<1x128xf32, #tpu.memory_space<vmem>>, vector<1x128xf32>
    %45 = arith.truncf %42 : vector<8x128xf32> to vector<8x128xbf16>
    %cst_33 = arith.constant dense<0.000000e+00> : vector<8x128xf32>
    %46 = tpu.matmul %45, %43, %cst_33 {dimension_numbers = #tpu.dot_dimension_numbers<[1], [0], [0], [1], [0, 0, 1, 1], [], []>} : vector<8x128xbf16>, vector<128x128xbf16>, vector<8x128xf32> -> vector<8x128xf32>
    %47 = vector.broadcast %44 : vector<1x128xf32> to vector<8x128xf32>
    %48 = arith.addf %46, %47 : vector<8x128xf32>
    %c0_34 = arith.constant 0 : index
    %c0_35 = arith.constant 0 : index
    %49 = vector.load %arg14[%c0_34, %c0_35] : memref<8x128xf32, #tpu.memory_space<vmem>>, vector<8x128xf32>
    tpu.vector_store %arg14[%c0_34, %c0_35], %48 {strides = array<i32>} : memref<8x128xf32, #tpu.memory_space<vmem>>, vector<8x128xf32>,
    return
  }
  func.func @transform_0(%arg0: i32) -> (i32, i32) {
    %c0_i32 = arith.constant 0 : i32
    %c0_i32_0 = arith.constant 0 : i32
    return %arg0, %c0_i32 : i32, i32
  }
  func.func @transform_1(%arg0: i32) -> (i32, i32) {
    %c0_i32 = arith.constant 0 : i32
    %c0_i32_0 = arith.constant 0 : i32
    %c0_i32_1 = arith.constant 0 : i32
    return %c0_i32, %c0_i32_0 : i32, i32
  }
  func.func @transform_2(%arg0: i32) -> (i32, i32) {
    %c0_i32 = arith.constant 0 : i32
    %c0_i32_0 = arith.constant 0 : i32
    %c0_i32_1 = arith.constant 0 : i32
    return %c0_i32, %c0_i32_0 : i32, i32
  }
  func.func @transform_3(%arg0: i32) -> (i32, i32) {
    %c0_i32 = arith.constant 0 : i32
    %c0_i32_0 = arith.constant 0 : i32
    %c0_i32_1 = arith.constant 0 : i32
    return %c0_i32, %c0_i32_0 : i32, i32
  }
  func.func @transform_4(%arg0: i32) -> (i32, i32) {
    %c0_i32 = arith.constant 0 : i32
    %c0_i32_0 = arith.constant 0 : i32
    %c0_i32_1 = arith.constant 0 : i32
    return %c0_i32, %c0_i32_0 : i32, i32
  }
  func.func @transform_5(%arg0: i32) -> (i32, i32) {
    %c0_i32 = arith.constant 0 : i32
    %c0_i32_0 = arith.constant 0 : i32
    %c0_i32_1 = arith.constant 0 : i32
    return %c0_i32, %c0_i32_0 : i32, i32
  }
  func.func @transform_6(%arg0: i32) -> (i32, i32) {
    %c0_i32 = arith.constant 0 : i32
    %c0_i32_0 = arith.constant 0 : i32
    %c0_i32_1 = arith.constant 0 : i32
    return %c0_i32, %c0_i32_0 : i32, i32
  }
  func.func @transform_7(%arg0: i32) -> (i32, i32) {
    %c0_i32 = arith.constant 0 : i32
    %c0_i32_0 = arith.constant 0 : i32
    %c0_i32_1 = arith.constant 0 : i32
    return %c0_i32, %c0_i32_0 : i32, i32
  }
  func.func @transform_8(%arg0: i32) -> (i32, i32) {
    %c0_i32 = arith.constant 0 : i32
    %c0_i32_0 = arith.constant 0 : i32
    %c0_i32_1 = arith.constant 0 : i32
    return %c0_i32, %c0_i32_0 : i32, i32
  }
  func.func @transform_9(%arg0: i32) -> (i32, i32) {
    %c0_i32 = arith.constant 0 : i32
    %c0_i32_0 = arith.constant 0 : i32
    %c0_i32_1 = arith.constant 0 : i32
    return %c0_i32, %c0_i32_0 : i32, i32
  }
  func.func @transform_10(%arg0: i32) -> (i32, i32) {
    %c0_i32 = arith.constant 0 : i32
    %c0_i32_0 = arith.constant 0 : i32
    %c0_i32_1 = arith.constant 0 : i32
    return %c0_i32, %c0_i32_0 : i32, i32
  }
  func.func @transform_11(%arg0: i32) -> (i32, i32) {
    %c0_i32 = arith.constant 0 : i32
    %c0_i32_0 = arith.constant 0 : i32
    %c0_i32_1 = arith.constant 0 : i32
    return %c0_i32, %c0_i32_0 : i32, i32
  }
  func.func @transform_12(%arg0: i32) -> (i32, i32) {
    %c0_i32 = arith.constant 0 : i32
    %c0_i32_0 = arith.constant 0 : i32
    %c0_i32_1 = arith.constant 0 : i32
    return %c0_i32, %c0_i32_0 : i32, i32
  }
  func.func @transform_13(%arg0: i32) -> (i32, i32) {
    %c0_i32 = arith.constant 0 : i32
    %c0_i32_0 = arith.constant 0 : i32
    return %arg0, %c0_i32 : i32, i32
  }
}

</mosaic_0001>

<llo_original>
// kernel: tpu_custom_call.1
$region0: #{tpu_custom_call.1}
  #allocation0 [shape = 'u32[]', space=smem, size = 0x4, offset = 0x4, fixed_abs, tag = 'smem constant byte address 0x4 - core index']
  #allocation1 [shape = 'u32[72,128]{1,0:T(1,128)}', space=vmem, size = 0x9000, scoped, tag = 'internal scratch']
  %s0 = inlined_call_operand.hbm [shape: f32[8,64], index: 0, kind: input, shape index: {}]
  %s1 = inlined_call_operand.hbm [shape: bf16[64,128], index: 1, kind: input, shape index: {}]
  %s2 = inlined_call_operand.vmem [shape: f32[1,128], index: 2, kind: input, shape index: {}]
  %s3 = inlined_call_operand.hbm [shape: bf16[128,128], index: 3, kind: input, shape index: {}]
  %s4 = inlined_call_operand.vmem [shape: f32[1,128], index: 4, kind: input, shape index: {}]
  %s5 = inlined_call_operand.hbm [shape: bf16[128,128], index: 5, kind: input, shape index: {}]
  %s6 = inlined_call_operand.vmem [shape: f32[1,128], index: 6, kind: input, shape index: {}]
  %s7 = inlined_call_operand.hbm [shape: bf16[128,128], index: 7, kind: input, shape index: {}]
  %s8 = inlined_call_operand.vmem [shape: f32[1,128], index: 8, kind: input, shape index: {}]
  %s9 = inlined_call_operand.hbm [shape: bf16[128,128], index: 9, kind: input, shape index: {}]
  %s10 = inlined_call_operand.vmem [shape: f32[1,128], index: 10, kind: input, shape index: {}]
  %s11 = inlined_call_operand.hbm [shape: bf16[128,128], index: 11, kind: input, shape index: {}]
  %s12 = inlined_call_operand.vmem [shape: f32[1,128], index: 12, kind: input, shape index: {}]
  %s13 = inlined_call_operand.hbm [shape: f32[8,128], index: 13, kind: output, shape index: {}]
  %s14 = sld [smem:[#allocation0]]
  $region90: #{tpu_custom_call.1} parent=0
    _
  %s16 = ssub.s32 1, %s14
  %s17 = scalar_select 0, %s16, %s14
  $region1: #{tpu_custom_call.1} parent=0
    #allocation2 [shape = 'u8[4096]{0}', space=vmem, size = 0x1000, scoped, tag = 'input window, operand 0, single buffered']
    #allocation3 [shape = 's32[1]{0}', space=sflag, size = 0x4, scoped, tag = 'scoped memory for tpu_custom_call.1']
    #allocation4 [shape = 's32[1]{0}', space=sflag, size = 0x4, scoped, tag = 'scoped memory for tpu_custom_call.1']
    #allocation5 [shape = 'u8[16384]{0}', space=vmem, size = 0x4000, scoped, tag = 'input window, operand 1, single buffered']
    #allocation6 [shape = 's32[1]{0}', space=sflag, size = 0x4, scoped, tag = 'scoped memory for tpu_custom_call.1']
    #allocation7 [shape = 'u8[32768]{0}', space=vmem, size = 0x8000, scoped, tag = 'input window, operand 3, single buffered']
    #allocation8 [shape = 'u8[32768]{0}', space=vmem, size = 0x8000, scoped, tag = 'input window, operand 5, single buffered']
    #allocation9 [shape = 's32[1]{0}', space=sflag, size = 0x4, scoped, tag = 'scoped memory for tpu_custom_call.1']
    #allocation10 [shape = 'u8[32768]{0}', space=vmem, size = 0x8000, scoped, tag = 'input window, operand 7, single buffered']
    #allocation11 [shape = 'u8[32768]{0}', space=vmem, size = 0x8000, scoped, tag = 'input window, operand 9, single buffered']
    #allocation12 [shape = 's32[1]{0}', space=sflag, size = 0x4, scoped, tag = 'scoped memory for tpu_custom_call.1']
    #allocation13 [shape = 'u8[32768]{0}', space=vmem, size = 0x8000, scoped, tag = 'input window, operand 11, single buffered']
    #allocation14 [shape = 'u8[4096]{0}', space=vmem, size = 0x1000, scoped, tag = 'output window, operand 0, single buffered']
    %18 = vsyncpa [#allocation3], 0
    %19 = vsyncpa [#allocation6], 0
    %20 = vsyncpa [#allocation9], 0
    %21 = vsyncpa [#allocation12], 0
    %22 = vsyncpa [#allocation4], 0
    // Predicated region
    $region2: #{tpu_custom_call.1} parent=1 // pred_check
      _
    $region3: #{tpu_custom_call.1} parent=1 // pred_check_branch
      %24 = sbr.rel (0) target = $region5
    $region4: #{tpu_custom_call.1} parent=1 // pred_region
      %26 = vsyncadd [#allocation3], 0
      %s28 = sshll.u32 %s0, 4
      %s29 = int_to_ptr.hbm [resolvable:$true] %s28
      %s30 = sshll.u32 [#allocation2], 4
      %s31 = int_to_ptr.vmem [resolvable:$true] %s30
      %33 = dma.hbm_to_vmem [thread:$0]  %s29, 128, %s31, [#allocation3]
    $region5: #{tpu_custom_call.1} parent=1 // pred_fallthru
      _
    // Predicated region
    $region6: #{tpu_custom_call.1} parent=1 // pred_check
      _
    $region7: #{tpu_custom_call.1} parent=1 // pred_check_branch
      %35 = sbr.rel (0) target = $region9
    $region8: #{tpu_custom_call.1} parent=1 // pred_region
      %37 = vsyncadd [#allocation6], 0
      %s38 = sshll.u32 %s1, 4
      %s39 = int_to_ptr.hbm [resolvable:$true] %s38
      %s40 = sshll.u32 [#allocation5], 4
      %s41 = int_to_ptr.vmem [resolvable:$true] %s40
      %46 = dma.hbm_to_vmem [thread:$0]  %s39, 512, %s41, [#allocation6], 64, 64, 4
    $region9: #{tpu_custom_call.1} parent=1 // pred_fallthru
      _
    // Predicated region
    $region10: #{tpu_custom_call.1} parent=1 // pred_check
      _
    $region11: #{tpu_custom_call.1} parent=1 // pred_check_branch
      %48 = sbr.rel (0) target = $region13
    $region12: #{tpu_custom_call.1} parent=1 // pred_region
      _
    $region13: #{tpu_custom_call.1} parent=1 // pred_fallthru
      _
    // Predicated region
    $region14: #{tpu_custom_call.1} parent=1 // pred_check
      _
    $region15: #{tpu_custom_call.1} parent=1 // pred_check_branch
      %50 = sbr.rel (0) target = $region17
    $region16: #{tpu_custom_call.1} parent=1 // pred_region
      %52 = vsyncadd [#allocation6], 0
      %s53 = sshll.u32 %s3, 4
      %s54 = int_to_ptr.hbm [resolvable:$true] %s53
      %s55 = sshll.u32 [#allocation7], 4
      %s56 = int_to_ptr.vmem [resolvable:$true] %s55
      %61 = dma.hbm_to_vmem [thread:$0]  %s54, 1024, %s56, [#allocation6], 64, 64, 4
    $region17: #{tpu_custom_call.1} parent=1 // pred_fallthru
      _
    // Predicated region
    $region18: #{tpu_custom_call.1} parent=1 // pred_check
      _
    $region19: #{tpu_custom_call.1} parent=1 // pred_check_branch
      %63 = sbr.rel (0) target = $region21
    $region20: #{tpu_custom_call.1} parent=1 // pred_region
      _
    $region21: #{tpu_custom_call.1} parent=1 // pred_fallthru
      _
    // Predicated region
    $region22: #{tpu_custom_call.1} parent=1 // pred_check
      _
    $region23: #{tpu_custom_call.1} parent=1 // pred_check_branch
      %65 = sbr.rel (0) target = $region25
    $region24: #{tpu_custom_call.1} parent=1 // pred_region
      %67 = vsyncadd [#allocation9], 0
      %s68 = sshll.u32 %s5, 4
      %s69 = int_to_ptr.hbm [resolvable:$true] %s68
      %s70 = sshll.u32 [#allocation8], 4
      %s71 = int_to_ptr.vmem [resolvable:$true] %s70
      %76 = dma.hbm_to_vmem [thread:$0]  %s69, 1024, %s71, [#allocation9], 64, 64, 4
    $region25: #{tpu_custom_call.1} parent=1 // pred_fallthru
      _
    // Predicated region
    $region26: #{tpu_custom_call.1} parent=1 // pred_check
      _
    $region27: #{tpu_custom_call.1} parent=1 // pred_check_branch
      %78 = sbr.rel (0) target = $region29
    $region28: #{tpu_custom_call.1} parent=1 // pred_region
      _
    $region29: #{tpu_custom_call.1} parent=1 // pred_fallthru
      _
    // Predicated region
    $region30: #{tpu_custom_call.1} parent=1 // pred_check
      _
    $region31: #{tpu_custom_call.1} parent=1 // pred_check_branch
      %80 = sbr.rel (0) target = $region33
    $region32: #{tpu_custom_call.1} parent=1 // pred_region
      %82 = vsyncadd [#allocation9], 0
      %s83 = sshll.u32 %s7, 4
      %s84 = int_to_ptr.hbm [resolvable:$true] %s83
      %s85 = sshll.u32 [#allocation10], 4
      %s86 = int_to_ptr.vmem [resolvable:$true] %s85
      %91 = dma.hbm_to_vmem [thread:$0]  %s84, 1024, %s86, [#allocation9], 64, 64, 4
    $region33: #{tpu_custom_call.1} parent=1 // pred_fallthru
      _
    // Predicated region
    $region34: #{tpu_custom_call.1} parent=1 // pred_check
      _
    $region35: #{tpu_custom_call.1} parent=1 // pred_check_branch
      %93 = sbr.rel (0) target = $region37
    $region36: #{tpu_custom_call.1} parent=1 // pred_region
      _
    $region37: #{tpu_custom_call.1} parent=1 // pred_fallthru
      _
    // Predicated region
    $region38: #{tpu_custom_call.1} parent=1 // pred_check
      _
    $region39: #{tpu_custom_call.1} parent=1 // pred_check_branch
      %95 = sbr.rel (0) target = $region41
    $region40: #{tpu_custom_call.1} parent=1 // pred_region
      %97 = vsyncadd [#allocation12], 0
      %s98 = sshll.u32 %s9, 4
      %s99 = int_to_ptr.hbm [resolvable:$true] %s98
      %s100 = sshll.u32 [#allocation11], 4
      %s101 = int_to_ptr.vmem [resolvable:$true] %s100
      %106 = dma.hbm_to_vmem [thread:$0]  %s99, 1024, %s101, [#allocation12], 64, 64, 4
    $region41: #{tpu_custom_call.1} parent=1 // pred_fallthru
      _
    // Predicated region
    $region42: #{tpu_custom_call.1} parent=1 // pred_check
      _
    $region43: #{tpu_custom_call.1} parent=1 // pred_check_branch
      %108 = sbr.rel (0) target = $region45
    $region44: #{tpu_custom_call.1} parent=1 // pred_region
      _
    $region45: #{tpu_custom_call.1} parent=1 // pred_fallthru
      _
    // Predicated region
    $region46: #{tpu_custom_call.1} parent=1 // pred_check
      _
    $region47: #{tpu_custom_call.1} parent=1 // pred_check_branch
      %110 = sbr.rel (0) target = $region49
    $region48: #{tpu_custom_call.1} parent=1 // pred_region
      %112 = vsyncadd [#allocation12], 0
      %s113 = sshll.u32 %s11, 4
      %s114 = int_to_ptr.hbm [resolvable:$true] %s113
      %s115 = sshll.u32 [#allocation13], 4
      %s116 = int_to_ptr.vmem [resolvable:$true] %s115
      %121 = dma.hbm_to_vmem [thread:$0]  %s114, 1024, %s116, [#allocation12], 64, 64, 4
    $region49: #{tpu_custom_call.1} parent=1 // pred_fallthru
      _
    // Predicated region
    $region50: #{tpu_custom_call.1} parent=1 // pred_check
      _
    $region51: #{tpu_custom_call.1} parent=1 // pred_check_branch
      %123 = sbr.rel (0) target = $region53
    $region52: #{tpu_custom_call.1} parent=1 // pred_region
      _
    $region53: #{tpu_custom_call.1} parent=1 // pred_fallthru
      _
    // Predicated region
    $region54: #{tpu_custom_call.1} parent=1 // pred_check
      _
    $region55: #{tpu_custom_call.1} parent=1 // pred_check_branch
      %125 = sbr.rel (0) target = $region57
    $region56: #{tpu_custom_call.1} parent=1 // pred_region
      %127 = dma.done [#allocation3], 128
    $region57: #{tpu_custom_call.1} parent=1 // pred_fallthru
      _
    // Predicated region
    $region58: #{tpu_custom_call.1} parent=1 // pred_check
      _
    $region59: #{tpu_custom_call.1} parent=1 // pred_check_branch
      %129 = sbr.rel (0) target = $region61
    $region60: #{tpu_custom_call.1} parent=1 // pred_region
      %131 = dma.done [#allocation6], 512
    $region61: #{tpu_custom_call.1} parent=1 // pred_fallthru
      _
    // Predicated region
    $region62: #{tpu_custom_call.1} parent=1 // pred_check
      _
    $region63: #{tpu_custom_call.1} parent=1 // pred_check_branch
      %133 = sbr.rel (0) target = $region65
    $region64: #{tpu_custom_call.1} parent=1 // pred_region
      %135 = dma.done [#allocation6], 1024
    $region65: #{tpu_custom_call.1} parent=1 // pred_fallthru
      _
    // Predicated region
    $region66: #{tpu_custom_call.1} parent=1 // pred_check
      _
    $region67: #{tpu_custom_call.1} parent=1 // pred_check_branch
      %137 = sbr.rel (0) target = $region69
    $region68: #{tpu_custom_call.1} parent=1 // pred_region
      %139 = dma.done [#allocation9], 1024
    $region69: #{tpu_custom_call.1} parent=1 // pred_fallthru
      _
    // Predicated region
    $region70: #{tpu_custom_call.1} parent=1 // pred_check
      _
    $region71: #{tpu_custom_call.1} parent=1 // pred_check_branch
      %141 = sbr.rel (0) target = $region73
    $region72: #{tpu_custom_call.1} parent=1 // pred_region
      %143 = dma.done [#allocation9], 1024
    $region73: #{tpu_custom_call.1} parent=1 // pred_fallthru
      _
    // Predicated region
    $region74: #{tpu_custom_call.1} parent=1 // pred_check
      _
    $region75: #{tpu_custom_call.1} parent=1 // pred_check_branch
      %145 = sbr.rel (0) target = $region77
    $region76: #{tpu_custom_call.1} parent=1 // pred_region
      %147 = dma.done [#allocation12], 1024
    $region77: #{tpu_custom_call.1} parent=1 // pred_fallthru
      _
    // Predicated region
    $region78: #{tpu_custom_call.1} parent=1 // pred_check
      _
    $region79: #{tpu_custom_call.1} parent=1 // pred_check_branch
      %149 = sbr.rel (0) target = $region81
    $region80: #{tpu_custom_call.1} parent=1 // pred_region
      %151 = dma.done [#allocation12], 1024
    $region81: #{tpu_custom_call.1} parent=1 // pred_fallthru
      _
    %v153 = vld [vmem:[#allocation2] sm:$0xff]
    %v154 = vld [vmem:[#allocation5] sm:$0xf]
    %v155 = vld [vmem:[#allocation5 + $0x4] sm:$0xf]
    %v156 = vld [vmem:[#allocation5 + $0x8] sm:$0xf]
    %v157 = vld [vmem:[#allocation5 + $0xc] sm:$0xf]
    %v158 = vld [vmem:[#allocation5 + $0x10] sm:$0xf]
    %v159 = vld [vmem:[#allocation5 + $0x14] sm:$0xf]
    %v160 = vld [vmem:[#allocation5 + $0x18] sm:$0xf]
    %v161 = vld [vmem:[#allocation5 + $0x1c] sm:$0xf]
    %v162 = vld [vmem:[%s2] sm:$0x1]
    %v163 = vpack.c.bf16 %v153, %v153
    %v165 = vperm.slane %v162, 0
    %v175 = vunpack.c.l.b16 %v154
    %v176 = vunpack.c.l.b16 %v155
    %v177 = vunpack.c.l.b16 %v156
    %v178 = vunpack.c.l.b16 %v157
    %v179 = vunpack.c.l.b16 %v158
    %v180 = vunpack.c.l.b16 %v159
    %v181 = vunpack.c.l.b16 %v160
    %v182 = vunpack.c.l.b16 %v161
    %v183 = vpack.c.b16 %v176, %v175
    %v184 = vpack.c.b16 %v178, %v177
    %v185 = vpack.c.b16 %v180, %v179
    %v186 = vpack.c.b16 %v182, %v181
    %vm191 = vcmask 523264
    %v193 = vsel %vm191, %v163, 0
    %195 = vmatpush.bf16.msra.mxu0 0
    %196 = vmatpush.bf16.msra.mxu0 0
    %197 = vmatpush.bf16.msra.mxu0 0
    %198 = vmatpush.bf16.msra.mxu0 0
    %199 = vmatpush.bf16.msra.mxu0 %v186
    %200 = vmatpush.bf16.msra.mxu0 %v185
    %201 = vmatpush.bf16.msra.mxu0 %v184
    %202 = vmatpush.bf16.msra.mxu0 %v183
    %203 = vmatmul.bf16.gmra.mxu0 %v193
    %v204 = vpop.f32.mrf.mxu0
    %v205 = vadd.f32 %v165, %v204
    %v206 = vpop.f32.mrf.mxu0
    %207 = vdwg.mxu0
    %v208 = vmul.f32 %v205, 0.01
    %v209 = vmax.f32 %v205, %v208
    %v210 = vld [vmem:[#allocation7] sm:$0xf]
    %v211 = vld [vmem:[#allocation7 + $0x4] sm:$0xf]
    %v212 = vld [vmem:[#allocation7 + $0x8] sm:$0xf]
    %v213 = vld [vmem:[#allocation7 + $0xc] sm:$0xf]
    %v214 = vld [vmem:[#allocation7 + $0x10] sm:$0xf]
    %v215 = vld [vmem:[#allocation7 + $0x14] sm:$0xf]
    %v216 = vld [vmem:[#allocation7 + $0x18] sm:$0xf]
    %v217 = vld [vmem:[#allocation7 + $0x1c] sm:$0xf]
    %v218 = vld [vmem:[#allocation7 + $0x20] sm:$0xf]
    %v219 = vld [vmem:[#allocation7 + $0x24] sm:$0xf]
    %v220 = vld [vmem:[#allocation7 + $0x28] sm:$0xf]
    %v221 = vld [vmem:[#allocation7 + $0x2c] sm:$0xf]
    %v222 = vld [vmem:[#allocation7 + $0x30] sm:$0xf]
    %v223 = vld [vmem:[#allocation7 + $0x34] sm:$0xf]
    %v224 = vld [vmem:[#allocation7 + $0x38] sm:$0xf]
    %v225 = vld [vmem:[#allocation7 + $0x3c] sm:$0xf]
    %v226 = vld [vmem:[%s4] sm:$0x1]
    %v227 = vpack.c.bf16 %v209, %v209
    %v229 = vperm.slane %v226, 0
    %v247 = vunpack.c.l.b16 %v210
    %v248 = vunpack.c.l.b16 %v211
    %v249 = vunpack.c.l.b16 %v212
    %v250 = vunpack.c.l.b16 %v213
    %v251 = vunpack.c.l.b16 %v214
    %v252 = vunpack.c.l.b16 %v215
    %v253 = vunpack.c.l.b16 %v216
    %v254 = vunpack.c.l.b16 %v217
    %v255 = vunpack.c.l.b16 %v218
    %v256 = vunpack.c.l.b16 %v219
    %v257 = vunpack.c.l.b16 %v220
    %v258 = vunpack.c.l.b16 %v221
    %v259 = vunpack.c.l.b16 %v222
    %v260 = vunpack.c.l.b16 %v223
    %v261 = vunpack.c.l.b16 %v224
    %v262 = vunpack.c.l.b16 %v225
    %v263 = vpack.c.b16 %v248, %v247
    %v264 = vpack.c.b16 %v250, %v249
    %v265 = vpack.c.b16 %v252, %v251
    %v266 = vpack.c.b16 %v254, %v253
    %v267 = vpack.c.b16 %v256, %v255
    %v268 = vpack.c.b16 %v258, %v257
    %v269 = vpack.c.b16 %v260, %v259
    %v270 = vpack.c.b16 %v262, %v261
    %279 = vmatpush.bf16.msra.mxu0 %v270
    %280 = vmatpush.bf16.msra.mxu0 %v269
    %281 = vmatpush.bf16.msra.mxu0 %v268
    %282 = vmatpush.bf16.msra.mxu0 %v267
    %283 = vmatpush.bf16.msra.mxu0 %v266
    %284 = vmatpush.bf16.msra.mxu0 %v265
    %285 = vmatpush.bf16.msra.mxu0 %v264
    %286 = vmatpush.bf16.msra.mxu0 %v263
    %287 = vmatmul.bf16.gmra.mxu0 %v227
    %v288 = vpop.f32.mrf.mxu0
    %v289 = vadd.f32 %v229, %v288
    %v290 = vpop.f32.mrf.mxu0
    %291 = vdwg.mxu0
    %v292 = vmul.f32 %v289, 0.01
    %v293 = vmax.f32 %v289, %v292
    %v294 = vld [vmem:[#allocation8] sm:$0xf]
    %v295 = vld [vmem:[#allocation8 + $0x4] sm:$0xf]
    %v296 = vld [vmem:[#allocation8 + $0x8] sm:$0xf]
    %v297 = vld [vmem:[#allocation8 + $0xc] sm:$0xf]
    %v298 = vld [vmem:[#allocation8 + $0x10] sm:$0xf]
    %v299 = vld [vmem:[#allocation8 + $0x14] sm:$0xf]
    %v300 = vld [vmem:[#allocation8 + $0x18] sm:$0xf]
    %v301 = vld [vmem:[#allocation8 + $0x1c] sm:$0xf]
    %v302 = vld [vmem:[#allocation8 + $0x20] sm:$0xf]
    %v303 = vld [vmem:[#allocation8 + $0x24] sm:$0xf]
    %v304 = vld [vmem:[#allocation8 + $0x28] sm:$0xf]
    %v305 = vld [vmem:[#allocation8 + $0x2c] sm:$0xf]
    %v306 = vld [vmem:[#allocation8 + $0x30] sm:$0xf]
    %v307 = vld [vmem:[#allocation8 + $0x34] sm:$0xf]
    %v308 = vld [vmem:[#allocation8 + $0x38] sm:$0xf]
    %v309 = vld [vmem:[#allocation8 + $0x3c] sm:$0xf]
    %v310 = vld [vmem:[%s6] sm:$0x1]
    %v311 = vpack.c.bf16 %v293, %v293
    %v313 = vperm.slane %v310, 0
    %v331 = vunpack.c.l.b16 %v294
    %v332 = vunpack.c.l.b16 %v295
    %v333 = vunpack.c.l.b16 %v296
    %v334 = vunpack.c.l.b16 %v297
    %v335 = vunpack.c.l.b16 %v298
    %v336 = vunpack.c.l.b16 %v299
    %v337 = vunpack.c.l.b16 %v300
    %v338 = vunpack.c.l.b16 %v301
    %v339 = vunpack.c.l.b16 %v302
    %v340 = vunpack.c.l.b16 %v303
    %v341 = vunpack.c.l.b16 %v304
    %v342 = vunpack.c.l.b16 %v305
    %v343 = vunpack.c.l.b16 %v306
    %v344 = vunpack.c.l.b16 %v307
    %v345 = vunpack.c.l.b16 %v308
    %v346 = vunpack.c.l.b16 %v309
    %v347 = vpack.c.b16 %v332, %v331
    %v348 = vpack.c.b16 %v334, %v333
    %v349 = vpack.c.b16 %v336, %v335
    %v350 = vpack.c.b16 %v338, %v337
    %v351 = vpack.c.b16 %v340, %v339
    %v352 = vpack.c.b16 %v342, %v341
    %v353 = vpack.c.b16 %v344, %v343
    %v354 = vpack.c.b16 %v346, %v345
    %363 = vmatpush.bf16.msra.mxu0 %v354
    %364 = vmatpush.bf16.msra.mxu0 %v353
    %365 = vmatpush.bf16.msra.mxu0 %v352
    %366 = vmatpush.bf16.msra.mxu0 %v351
    %367 = vmatpush.bf16.msra.mxu0 %v350
    %368 = vmatpush.bf16.msra.mxu0 %v349
    %369 = vmatpush.bf16.msra.mxu0 %v348
    %370 = vmatpush.bf16.msra.mxu0 %v347
    %371 = vmatmul.bf16.gmra.mxu0 %v311
    %v372 = vpop.f32.mrf.mxu0
    %v373 = vadd.f32 %v313, %v372
    %v374 = vpop.f32.mrf.mxu0
    %375 = vdwg.mxu0
    %v376 = vld [vmem:[#allocation10] sm:$0xf]
    %v377 = vld [vmem:[#allocation10 + $0x4] sm:$0xf]
    %v378 = vld [vmem:[#allocation10 + $0x8] sm:$0xf]
    %v379 = vld [vmem:[#allocation10 + $0xc] sm:$0xf]
    %v380 = vld [vmem:[#allocation10 + $0x10] sm:$0xf]
    %v381 = vld [vmem:[#allocation10 + $0x14] sm:$0xf]
    %v382 = vld [vmem:[#allocation10 + $0x18] sm:$0xf]
    %v383 = vld [vmem:[#allocation10 + $0x1c] sm:$0xf]
    %v384 = vld [vmem:[#allocation10 + $0x20] sm:$0xf]
    %v385 = vld [vmem:[#allocation10 + $0x24] sm:$0xf]
    %v386 = vld [vmem:[#allocation10 + $0x28] sm:$0xf]
    %v387 = vld [vmem:[#allocation10 + $0x2c] sm:$0xf]
    %v388 = vld [vmem:[#allocation10 + $0x30] sm:$0xf]
    %v389 = vld [vmem:[#allocation10 + $0x34] sm:$0xf]
    %v390 = vld [vmem:[#allocation10 + $0x38] sm:$0xf]
    %v391 = vld [vmem:[#allocation10 + $0x3c] sm:$0xf]
    %v392 = vld [vmem:[%s8] sm:$0x1]
    %v393 = vpack.c.bf16 %v373, %v373
    %v395 = vperm.slane %v392, 0
    %v413 = vunpack.c.l.b16 %v376
    %v414 = vunpack.c.l.b16 %v377
    %v415 = vunpack.c.l.b16 %v378
    %v416 = vunpack.c.l.b16 %v379
    %v417 = vunpack.c.l.b16 %v380
    %v418 = vunpack.c.l.b16 %v381
    %v419 = vunpack.c.l.b16 %v382
    %v420 = vunpack.c.l.b16 %v383
    %v421 = vunpack.c.l.b16 %v384
    %v422 = vunpack.c.l.b16 %v385
    %v423 = vunpack.c.l.b16 %v386
    %v424 = vunpack.c.l.b16 %v387
    %v425 = vunpack.c.l.b16 %v388
    %v426 = vunpack.c.l.b16 %v389
    %v427 = vunpack.c.l.b16 %v390
    %v428 = vunpack.c.l.b16 %v391
    %v429 = vpack.c.b16 %v414, %v413
    %v430 = vpack.c.b16 %v416, %v415
    %v431 = vpack.c.b16 %v418, %v417
    %v432 = vpack.c.b16 %v420, %v419
    %v433 = vpack.c.b16 %v422, %v421
    %v434 = vpack.c.b16 %v424, %v423
    %v435 = vpack.c.b16 %v426, %v425
    %v436 = vpack.c.b16 %v428, %v427
    %445 = vmatpush.bf16.msra.mxu0 %v436
    %446 = vmatpush.bf16.msra.mxu0 %v435
    %447 = vmatpush.bf16.msra.mxu0 %v434
    %448 = vmatpush.bf16.msra.mxu0 %v433
    %449 = vmatpush.bf16.msra.mxu0 %v432
    %450 = vmatpush.bf16.msra.mxu0 %v431
    %451 = vmatpush.bf16.msra.mxu0 %v430
    %452 = vmatpush.bf16.msra.mxu0 %v429
    %453 = vmatmul.bf16.gmra.mxu0 %v393
    %v454 = vpop.f32.mrf.mxu0
    %v455 = vadd.f32 %v395, %v454
    %v456 = vpop.f32.mrf.mxu0
    %457 = vdwg.mxu0
    %v458 = vmul.f32 %v455, 0.01
    %v459 = vmax.f32 %v455, %v458
    %v460 = vld [vmem:[#allocation11] sm:$0xf]
    %v461 = vld [vmem:[#allocation11 + $0x4] sm:$0xf]
    %v462 = vld [vmem:[#allocation11 + $0x8] sm:$0xf]
    %v463 = vld [vmem:[#allocation11 + $0xc] sm:$0xf]
    %v464 = vld [vmem:[#allocation11 + $0x10] sm:$0xf]
    %v465 = vld [vmem:[#allocation11 + $0x14] sm:$0xf]
    %v466 = vld [vmem:[#allocation11 + $0x18] sm:$0xf]
    %v467 = vld [vmem:[#allocation11 + $0x1c] sm:$0xf]
    %v468 = vld [vmem:[#allocation11 + $0x20] sm:$0xf]
    %v469 = vld [vmem:[#allocation11 + $0x24] sm:$0xf]
    %v470 = vld [vmem:[#allocation11 + $0x28] sm:$0xf]
    %v471 = vld [vmem:[#allocation11 + $0x2c] sm:$0xf]
    %v472 = vld [vmem:[#allocation11 + $0x30] sm:$0xf]
    %v473 = vld [vmem:[#allocation11 + $0x34] sm:$0xf]
    %v474 = vld [vmem:[#allocation11 + $0x38] sm:$0xf]
    %v475 = vld [vmem:[#allocation11 + $0x3c] sm:$0xf]
    %v476 = vld [vmem:[%s10] sm:$0x1]
    %v477 = vpack.c.bf16 %v459, %v459
    %v479 = vperm.slane %v476, 0
    %v497 = vunpack.c.l.b16 %v460
    %v498 = vunpack.c.l.b16 %v461
    %v499 = vunpack.c.l.b16 %v462
    %v500 = vunpack.c.l.b16 %v463
    %v501 = vunpack.c.l.b16 %v464
    %v502 = vunpack.c.l.b16 %v465
    %v503 = vunpack.c.l.b16 %v466
    %v504 = vunpack.c.l.b16 %v467
    %v505 = vunpack.c.l.b16 %v468
    %v506 = vunpack.c.l.b16 %v469
    %v507 = vunpack.c.l.b16 %v470
    %v508 = vunpack.c.l.b16 %v471
    %v509 = vunpack.c.l.b16 %v472
    %v510 = vunpack.c.l.b16 %v473
    %v511 = vunpack.c.l.b16 %v474
    %v512 = vunpack.c.l.b16 %v475
    %v513 = vpack.c.b16 %v498, %v497
    %v514 = vpack.c.b16 %v500, %v499
    %v515 = vpack.c.b16 %v502, %v501
    %v516 = vpack.c.b16 %v504, %v503
    %v517 = vpack.c.b16 %v506, %v505
    %v518 = vpack.c.b16 %v508, %v507
    %v519 = vpack.c.b16 %v510, %v509
    %v520 = vpack.c.b16 %v512, %v511
    %529 = vmatpush.bf16.msra.mxu0 %v520
    %530 = vmatpush.bf16.msra.mxu0 %v519
    %531 = vmatpush.bf16.msra.mxu0 %v518
    %532 = vmatpush.bf16.msra.mxu0 %v517
    %533 = vmatpush.bf16.msra.mxu0 %v516
    %534 = vmatpush.bf16.msra.mxu0 %v515
    %535 = vmatpush.bf16.msra.mxu0 %v514
    %536 = vmatpush.bf16.msra.mxu0 %v513
    %537 = vmatmul.bf16.gmra.mxu0 %v477
    %v538 = vpop.f32.mrf.mxu0
    %v539 = vadd.f32 %v479, %v538
    %v540 = vpop.f32.mrf.mxu0
    %541 = vdwg.mxu0
    %v542 = vmul.f32 %v539, 0.01
    %v543 = vmax.f32 %v539, %v542
    %v544 = vld [vmem:[#allocation13] sm:$0xf]
    %v545 = vld [vmem:[#allocation13 + $0x4] sm:$0xf]
    %v546 = vld [vmem:[#allocation13 + $0x8] sm:$0xf]
    %v547 = vld [vmem:[#allocation13 + $0xc] sm:$0xf]
    %v548 = vld [vmem:[#allocation13 + $0x10] sm:$0xf]
    %v549 = vld [vmem:[#allocation13 + $0x14] sm:$0xf]
    %v550 = vld [vmem:[#allocation13 + $0x18] sm:$0xf]
    %v551 = vld [vmem:[#allocation13 + $0x1c] sm:$0xf]
    %v552 = vld [vmem:[#allocation13 + $0x20] sm:$0xf]
    %v553 = vld [vmem:[#allocation13 + $0x24] sm:$0xf]
    %v554 = vld [vmem:[#allocation13 + $0x28] sm:$0xf]
    %v555 = vld [vmem:[#allocation13 + $0x2c] sm:$0xf]
    %v556 = vld [vmem:[#allocation13 + $0x30] sm:$0xf]
    %v557 = vld [vmem:[#allocation13 + $0x34] sm:$0xf]
    %v558 = vld [vmem:[#allocation13 + $0x38] sm:$0xf]
    %v559 = vld [vmem:[#allocation13 + $0x3c] sm:$0xf]
    %v560 = vld [vmem:[%s12] sm:$0x1]
    %v561 = vpack.c.bf16 %v543, %v543
    %v563 = vperm.slane %v560, 0
    %v581 = vunpack.c.l.b16 %v544
    %v582 = vunpack.c.l.b16 %v545
    %v583 = vunpack.c.l.b16 %v546
    %v584 = vunpack.c.l.b16 %v547
    %v585 = vunpack.c.l.b16 %v548
    %v586 = vunpack.c.l.b16 %v549
    %v587 = vunpack.c.l.b16 %v550
    %v588 = vunpack.c.l.b16 %v551
    %v589 = vunpack.c.l.b16 %v552
    %v590 = vunpack.c.l.b16 %v553
    %v591 = vunpack.c.l.b16 %v554
    %v592 = vunpack.c.l.b16 %v555
    %v593 = vunpack.c.l.b16 %v556
    %v594 = vunpack.c.l.b16 %v557
    %v595 = vunpack.c.l.b16 %v558
    %v596 = vunpack.c.l.b16 %v559
    %v597 = vpack.c.b16 %v582, %v581
    %v598 = vpack.c.b16 %v584, %v583
    %v599 = vpack.c.b16 %v586, %v585
    %v600 = vpack.c.b16 %v588, %v587
    %v601 = vpack.c.b16 %v590, %v589
    %v602 = vpack.c.b16 %v592, %v591
    %v603 = vpack.c.b16 %v594, %v593
    %v604 = vpack.c.b16 %v596, %v595
    %613 = vmatpush.bf16.msra.mxu0 %v604
    %614 = vmatpush.bf16.msra.mxu0 %v603
    %615 = vmatpush.bf16.msra.mxu0 %v602
    %616 = vmatpush.bf16.msra.mxu0 %v601
    %617 = vmatpush.bf16.msra.mxu0 %v600
    %618 = vmatpush.bf16.msra.mxu0 %v599
    %619 = vmatpush.bf16.msra.mxu0 %v598
    %620 = vmatpush.bf16.msra.mxu0 %v597
    %621 = vmatmul.bf16.gmra.mxu0 %v561
    %v622 = vpop.f32.mrf.mxu0
    %v623 = vadd.f32 %v563, %v622
    %v624 = vpop.f32.mrf.mxu0
    %625 = vdwg.mxu0
    %626 = vst [vmem:[#allocation14] sm:$0xff] %v623
    // Predicated region
    $region82: #{tpu_custom_call.1} parent=1 // pred_check
      _
    $region83: #{tpu_custom_call.1} parent=1 // pred_check_branch
      %628 = sbr.rel (0) target = $region85
    $region84: #{tpu_custom_call.1} parent=1 // pred_region
      %630 = vsyncadd [#allocation4], 0
      %s632 = sshll.u32 [#allocation14], 4
      %s633 = int_to_ptr.vmem [resolvable:$true] %s632
      %s634 = sshll.u32 %s13, 4
      %s635 = int_to_ptr.hbm [resolvable:$true] %s634
      %637 = dma.vmem_to_hbm [thread:$0]  %s633, 128, %s635, [#allocation4]
    $region85: #{tpu_custom_call.1} parent=1 // pred_fallthru
      _
    // Predicated region
    $region86: #{tpu_custom_call.1} parent=1 // pred_check
      _
    $region87: #{tpu_custom_call.1} parent=1 // pred_check_branch
      %639 = sbr.rel (0) target = $region89
    $region88: #{tpu_custom_call.1} parent=1 // pred_region
      %641 = dma.done [#allocation4], 128
    $region89: #{tpu_custom_call.1} parent=1 // pred_fallthru
      _
    %642 = vsyncpa [#allocation3], 1
    %643 = vsyncpa [#allocation6], 1
    %644 = vsyncpa [#allocation9], 1
    %645 = vsyncpa [#allocation12], 1
    %646 = vsyncpa [#allocation4], 1

</llo_original>
